<compile_context>
chip_gen: v5e
topology: v5e:2x2
jax: 0.10.0
libtpu: 0.0.40
codegen_flags: <defaults>
</compile_context>

<pallas_src>
import functools

import jax
import jax.numpy as jnp
from jax.experimental import pallas as pl
from jax.experimental.pallas import tpu as pltpu

_MIB = 1024 * 1024


def _sublane_multiple(dtype) -> int:
    """Packed sublane count: 8 for 32-bit, 16 for 16-bit, 32 for 8-bit dtypes."""
    bits = jnp.dtype(dtype).itemsize * 8
    return (32 // bits) * 8


def _round_up(x: int, m: int) -> int:
    return ((x + m - 1) // m) * m


def _vmem_capacity_bytes() -> int:
    """Per-core VMEM capacity; conservative (v7x: 64 MiB/TC) fallback."""
    try:
        info = pltpu.get_tpu_info()
        for name in ("vmem_capacity_bytes", "vmem_bytes", "vmem_size_bytes"):
            cap = getattr(info, name, None)
            if cap:
                return int(cap)
    except Exception:
        pass
    return 64 * _MIB


def _global_sum_pool_kernel(x_ref, o_ref, acc_ref, *, n_total, tn, needs_mask):
    # Grid = (b, d, k): batch/feature axes are "parallel", the reduction axis k
    # is last and "arbitrary"; the accumulator persists across the k sweep.
    k = pl.program_id(2)
    n_k = pl.num_programs(2)

    @pl.when(k == 0)
    def _init():
        acc_ref[...] = jnp.zeros_like(acc_ref)

    def _accum(x):
        # TODO(synk): a (1, sub, td) accumulator would keep the sublane
        # reduction on the VPU instead of the XLU; irrelevant while HBM-bound.
        acc_ref[...] += jnp.sum(x.astype(acc_ref.dtype), axis=1, keepdims=True)

    if needs_mask:
        # Unmasked accumulate for every full block ...
        @pl.when(k < n_k - 1)
        def _body():
            _accum(x_ref[...])

        # ... masking (in the input dtype, before the upcast) only on the tail.
        @pl.when(k == n_k - 1)
        def _tail():
            x = x_ref[...]
            row = jax.lax.broadcasted_iota(jnp.int32, x.shape, 1)
            x = jnp.where(row < (n_total - k * tn), x, jnp.zeros_like(x))
            _accum(x)
    else:
        _accum(x_ref[...])

    @pl.when(k == n_k - 1)
    def _finalize():
        o_ref[...] = acc_ref[...].astype(o_ref.dtype)


def global_sum_pool1d(
    x,
    *,
    dim=1,
    tn=None,
    td=None,
    target_block_bytes=None,
    vmem_limit_bytes=None,
    input_buffer_count=None,
    force_pallas=False,
    small_input_bytes=1 * _MIB,
):
    """Sum a (B, N, D) array over dim=1 with a Pallas TPU kernel."""
    if dim != 1 or x.ndim != 3:
        # TODO(synk): kernel covers the module's default (dim=1 on 3-D input);
        # other dims fall back to XLA's fused reduce.
        return jnp.sum(x, axis=dim)

    B, N, D = x.shape
    itemsize = jnp.dtype(x.dtype).itemsize
    sub = _sublane_multiple(x.dtype)

    # Tiny-input fast path: a single-block pallas_call is pure dispatch
    # overhead; XLA's fused reduce is strictly better there.
    if not force_pallas and B * N * D * itemsize < small_input_bytes:
        return jnp.sum(x, axis=1)

    # --- Per-generation block / VMEM sizing (trace-time hardware query). ---
    vmem_cap = _vmem_capacity_bytes()
    if vmem_limit_bytes is None:
        # ~3/4 of per-core VMEM, capped at 64 MiB: ~48 MiB on v7x (64 MiB/TC),
        # 64 MiB on v5e/v6e (128 MiB physical).
        vmem_limit_bytes = min(vmem_cap * 3 // 4, 64 * _MIB)
    if target_block_bytes is None:
        # Two in-flight (double-buffered) input blocks + output/acc headroom.
        target_block_bytes = vmem_limit_bytes // 3

    # --- Feature tile: prefer the full extent D (contiguous HBM slabs). ---
    if td is None:
        td = D
        # Split D only if a minimal (1, sub, D) block would blow the budget,
        # or if B == 1 and we want a >=2-wide parallel axis (v7x second core).
        if D % 256 == 0 and (B == 1 or sub * D * itemsize > target_block_bytes):
            td = D // 2
            while td % 256 == 0 and sub * td * itemsize > target_block_bytes:
                td //= 2
    assert td == D or (D % td == 0 and td % 128 == 0), (
        "td must divide D and be 128-aligned")

    # --- Reduction tile: as large as fits the block budget, sublane-aligned. ---
    if tn is None:
        tn = max(sub, (target_block_bytes // max(1, td * itemsize)) // sub * sub)
        tn = min(tn, _round_up(N, sub))
    assert tn % sub == 0, "tn must respect dtype sublane packing (8/16/32)"

    n_d = pl.cdiv(D, td)
    n_k = pl.cdiv(N, tn)
    needs_mask = (N % tn) != 0

    # NOTE: integer inputs accumulate in int32; pathological N * max|x| near
    # 2**31 would overflow (not reachable for this module's typical shapes).
    acc_dtype = jnp.float32 if jnp.issubdtype(x.dtype, jnp.floating) else jnp.int32

    kernel = functools.partial(
        _global_sum_pool_kernel, n_total=N, tn=tn, needs_mask=needs_mask)

    in_spec_kwargs = {}
    if input_buffer_count is not None:
        # Optional deeper pipelining sweep (re-check the v7x VMEM budget).
        in_spec_kwargs["pipeline_mode"] = pl.Buffered(input_buffer_count)

    out3d = pl.pallas_call(
        kernel,
        out_shape=jax.ShapeDtypeStruct((B, 1, D), x.dtype),
        grid_spec=pltpu.PrefetchScalarGridSpec(
            num_scalar_prefetch=0,
            grid=(B, n_d, n_k),  # parallel batch/feature axes first, reduction last
            in_specs=[pl.BlockSpec((1, tn, td), lambda b, d, k: (b, k, d),
                                   **in_spec_kwargs)],
            out_specs=pl.BlockSpec((1, 1, td), lambda b, d, k: (b, 0, d)),
            scratch_shapes=[pltpu.VMEM((1, 1, td), acc_dtype)],
        ),
        compiler_params=pltpu.CompilerParams(
            dimension_semantics=("parallel", "parallel", "arbitrary"),
            vmem_limit_bytes=int(vmem_limit_bytes),
        ),
    )(x)
    return out3d.reshape(B, D)


if __name__ == "__main__":
    key = jax.random.PRNGKey(0)

    # Small shapes consistent with the module: batch=2, nodes/seq=16, hidden=128.
    B, N, D = 2, 16, 128
    x = jax.random.normal(key, (B, N, D), dtype=jnp.float32)
    out = jax.block_until_ready(global_sum_pool1d(x, force_pallas=True))
    ref = jnp.sum(x, axis=1)
    assert out.shape == ref.shape == (B, D)
    assert jnp.allclose(out, ref, atol=1e-5, rtol=1e-5)

    # Masked tail path, now gated onto the last reduction step only.
    x2 = jax.random.normal(jax.random.PRNGKey(1), (2, 20, 128), dtype=jnp.float32)
    out2 = jax.block_until_ready(global_sum_pool1d(x2, tn=8, force_pallas=True))
    assert jnp.allclose(out2, jnp.sum(x2, axis=1), atol=1e-5, rtol=1e-5)

    # bf16 input: f32 scratch accumulation, single cast on the final store.
    x3 = jax.random.normal(jax.random.PRNGKey(2), (2, 48, 128), dtype=jnp.bfloat16)
    out3 = jax.block_until_ready(global_sum_pool1d(x3, force_pallas=True))
    ref3 = jnp.sum(x3.astype(jnp.float32), axis=1).astype(jnp.bfloat16)
    assert jnp.allclose(out3.astype(jnp.float32), ref3.astype(jnp.float32),
                        atol=1e-1, rtol=1e-2)

    # Multi-step reduction (several k blocks per (b, d) tile, no mask).
    x4 = jax.random.normal(jax.random.PRNGKey(3), (2, 64, 128), dtype=jnp.float32)
    out4 = jax.block_until_ready(global_sum_pool1d(x4, tn=16, force_pallas=True))
    assert jnp.allclose(out4, jnp.sum(x4, axis=1), atol=1e-4, rtol=1e-5)

    # Tiny-input fast path (plain jnp.sum) still matches.
    out5 = jax.block_until_ready(global_sum_pool1d(x))
    assert jnp.allclose(out5, ref, atol=1e-5, rtol=1e-5)

    print("KERNEL_OK")
</pallas_src>

<mosaic_0001>
module attributes {stable_mosaic.version = 11 : i64} {
  func.func @_global_sum_pool_kernel(%arg0: i32, %arg1: i32, %arg2: i32, %arg3: memref<1x16x128xf32, #tpu.memory_space<vmem>>, %arg4: memref<1x1x128xf32, #tpu.memory_space<vmem>>, %arg5: memref<1x1x128xf32, #tpu.memory_space<vmem>>) attributes {dimension_semantics = [#tpu.dimension_semantics<parallel>, #tpu.dimension_semantics<parallel>, #tpu.dimension_semantics<arbitrary>], iteration_bounds = array<i64: 2, 1, 1>, scalar_prefetch = 0 : i64, scratch_operands = 1 : i64, tpu.core_type = #tpu.core_type<tc>, window_params = [{transform_indices = @transform_0, window_bounds = array<i64: 1, 16, 128>}, {transform_indices = @transform_1, window_bounds = array<i64: 1, 1, 128>}]} {
    %c0_i32 = arith.constant 0 : i32
    %0 = arith.cmpi eq, %arg2, %c0_i32 : i32
    %1 = arith.extui %0 : i1 to i32
    %c0_i32_0 = arith.constant 0 : i32
    %2 = arith.cmpi ne, %1, %c0_i32_0 : i32
    scf.if %2 {
      %cst_11 = arith.constant 0.000000e+00 : f32
      %12 = vector.broadcast %cst_11 : f32 to vector<1x1x128xf32>
      %c0_12 = arith.constant 0 : index
      %c0_13 = arith.constant 0 : index
      %c0_14 = arith.constant 0 : index
      %13 = vector.load %arg5[%c0_12, %c0_13, %c0_14] : memref<1x1x128xf32, #tpu.memory_space<vmem>>, vector<1x1x128xf32>
      tpu.vector_store %arg5[%c0_12, %c0_13, %c0_14], %12 {strides = array<i32>} : memref<1x1x128xf32, #tpu.memory_space<vmem>>, vector<1x1x128xf32>,
    } else {
    }
    %c0 = arith.constant 0 : index
    %c0_1 = arith.constant 0 : index
    %c0_2 = arith.constant 0 : index
    %3 = vector.load %arg3[%c0, %c0_1, %c0_2] : memref<1x16x128xf32, #tpu.memory_space<vmem>>, vector<1x16x128xf32>
    %c0_3 = arith.constant 0 : index
    %c0_4 = arith.constant 0 : index
    %c0_5 = arith.constant 0 : index
    %4 = vector.load %arg5[%c0_3, %c0_4, %c0_5] : memref<1x1x128xf32, #tpu.memory_space<vmem>>, vector<1x1x128xf32>
    %cst = arith.constant dense<0.000000e+00> : vector<1x128xf32>
    %5 = vector.multi_reduction <add>, %3, %cst [1] : vector<1x16x128xf32> to vector<1x128xf32>
    %6 = vector.shape_cast %5 : vector<1x128xf32> to vector<1x1x128xf32>
    %7 = arith.addf %4, %6 : vector<1x1x128xf32>
    %c0_6 = arith.constant 0 : index
    %c0_7 = arith.constant 0 : index
    %c0_8 = arith.constant 0 : index
    %8 = vector.load %arg5[%c0_6, %c0_7, %c0_8] : memref<1x1x128xf32, #tpu.memory_space<vmem>>, vector<1x1x128xf32>
    tpu.vector_store %arg5[%c0_6, %c0_7, %c0_8], %7 {strides = array<i32>} : memref<1x1x128xf32, #tpu.memory_space<vmem>>, vector<1x1x128xf32>,
    %c0_i32_9 = arith.constant 0 : i32
    %9 = arith.cmpi eq, %arg2, %c0_i32_9 : i32
    %10 = arith.extui %9 : i1 to i32
    %c0_i32_10 = arith.constant 0 : i32
    %11 = arith.cmpi ne, %10, %c0_i32_10 : i32
    scf.if %11 {
      %c0_11 = arith.constant 0 : index
      %c0_12 = arith.constant 0 : index
      %c0_13 = arith.constant 0 : index
      %12 = vector.load %arg5[%c0_11, %c0_12, %c0_13] : memref<1x1x128xf32, #tpu.memory_space<vmem>>, vector<1x1x128xf32>
      %c0_14 = arith.constant 0 : index
      %c0_15 = arith.constant 0 : index
      %c0_16 = arith.constant 0 : index
      %13 = vector.load %arg4[%c0_14, %c0_15, %c0_16] : memref<1x1x128xf32, #tpu.memory_space<vmem>>, vector<1x1x128xf32>
      tpu.vector_store %arg4[%c0_14, %c0_15, %c0_16], %12 {strides = array<i32>} : memref<1x1x128xf32, #tpu.memory_space<vmem>>, vector<1x1x128xf32>,
    } else {
    }
    return
  }
  func.func @transform_0(%arg0: i32, %arg1: i32, %arg2: i32) -> (i32, i32, i32) {
    %c0_i32 = arith.constant 0 : i32
    return %arg0, %arg2, %arg1 : i32, i32, i32
  }
  func.func @transform_1(%arg0: i32, %arg1: i32, %arg2: i32) -> (i32, i32, i32) {
    %c0_i32 = arith.constant 0 : i32
    %c0_i32_0 = arith.constant 0 : i32
    return %arg0, %c0_i32, %arg1 : i32, i32, i32
  }
}

</mosaic_0001>

<llo_original>
// kernel: tpu_custom_call.1
$region0: #{tpu_custom_call.1}
  #allocation0 [shape = 'u32[]', space=smem, size = 0x4, offset = 0x4, fixed_abs, tag = 'smem constant byte address 0x4 - core index']
  #allocation1 [shape = 'u32[72,128]{1,0:T(1,128)}', space=vmem, size = 0x9000, scoped, tag = 'internal scratch']
  #allocation2 [shape = 'f32[1,1,128]{2,1,0:T(1,128)}', space=vmem, size = 0x200, scoped, tag = 'scratch operand']
  %s0 = inlined_call_operand.hbm [shape: f32[2,16,128], index: 0, kind: input, shape index: {}]
  %s1 = inlined_call_operand.hbm [shape: f32[2,1,128], index: 1, kind: output, shape index: {}]
  %s2 = sld [smem:[#allocation0]]
  $region49: #{tpu_custom_call.1} parent=0
    _
  %s4 = ssub.s32 1, %s2
  %s5 = scalar_select 0, %s4, %s2
  $region1: #{tpu_custom_call.1} parent=0
    #allocation3 [shape = 'u8[16384]{0}', space=vmem, size = 0x4000, scoped, tag = 'input window, operand 0']
    #allocation4 [shape = 's32[2]{0}', space=sflag, size = 0x8, scoped, tag = 'scoped memory for tpu_custom_call.1']
    #allocation5 [shape = 's32[2]{0}', space=sflag, size = 0x8, scoped, tag = 'scoped memory for tpu_custom_call.1']
    #allocation6 [shape = 'u8[1024]{0}', space=vmem, size = 0x400, scoped, tag = 'output window, operand 0']
    %6 = vsyncpa [#allocation4], 0
    %s7 = scalar_lea.sflag [#allocation4], 1
    %8 = vsyncpa %s7, 0
    %9 = vsyncpa [#allocation5], 0
    %s10 = scalar_lea.sflag [#allocation5], 1
    %11 = vsyncpa %s10, 0
    loop: start=0, step=1, limit=4
    $region2: #{tpu_custom_call.1} parent=1 // loop_pre_header
      _
    $region3: #{tpu_custom_call.1} parent=1 // loop_header
      %s13 = sphi 0, %s17
      %p14 = scmp.ge.s32.totalorder %s13, 4
      %s20 = sphi 0, %s39
      %s21 = sphi 0, %s35
      %s22 = sphi 0, %s31
      %s23 = sphi 0, %s20
      %s24 = sphi 0, %s21
      %s25 = sphi 0, %s22
      %s26 = sphi 0, %s23
      %s27 = sphi 0, %s24
      %s28 = sphi 0, %s25
      %s46 = sphi 0, %s48
      %s49 = sphi 0, %s46
      %s50 = sphi 0, %s49
      %s66 = sphi 0, %s50
      %s74 = sphi 0, %s76
      %s77 = sphi 0, %s74
      %s78 = sphi 0, %s77
      %s94 = sphi 0, %s78
    $region4: #{tpu_custom_call.1} parent=1 // loop_header_branch
      %16 = sbr.rel (%p14) target = $region8
    $region5: #{tpu_custom_call.1} parent=1 // loop_body
      %s18 = ssub.s32 %s13, 1
      %s19 = ssub.s32 %s13, 2
      %s29 = sadd.s32 1, %s22
      %p30 = scmp.ge.s32.totalorder %s29, 1
      %s31 = scalar_select %p30, 0, %s29
      %s32 = sadd.s32 1, %s21
      %s33 = scalar_select %p30, %s32, %s21
      %p34 = scmp.ge.s32.totalorder %s33, 1
      %s35 = scalar_select %p34, 0, %s33
      %s36 = sadd.s32 1, %s20
      %s37 = scalar_select %p34, %s36, %s20
      %p38 = scmp.ge.s32.totalorder %s37, 2
      %s39 = scalar_select %p38, 0, %s37
      %s40 = ssub.s32 %s20, %s39
      %s41 = ssub.s32 %s22, %s31
      %s42 = sor.u32 %s40, %s41
      %s43 = ssub.s32 %s21, %s35
      %s44 = sor.u32 %s42, %s43
      %p45 = scmp.eq.s32.totalorder %s44, 0
      %s47 = sadd.s32 %s46, 1
      %s48 = scalar_select %p45, %s46, %s47
      %p51 = pneg %p45
      %p52 = scmp.eq.s32.totalorder %s13, 1
      %p53 = por %p51, %p52
      %p54 = scmp.ne.s32.totalorder %s46, %s49
      %p55 = scmp.eq.s32.totalorder %s13, 0
      %p56 = por %p54, %p55
      %p57 = scmp.ne.s32.totalorder %s46, %s49
      %p58 = scmp.eq.s32.totalorder %s18, 1
      %p59 = por %p57, %p58
      %p60 = scmp.ne.s32.totalorder %s49, %s50
      %p61 = scmp.eq.s32.totalorder %s18, 0
      %p62 = por %p60, %p61
      %p63 = scmp.ne.s32.totalorder %s49, %s50
      %p64 = scmp.eq.s32.totalorder %s19, 1
      %p65 = por %p63, %p64
      %p67 = scmp.ne.s32.totalorder %s50, %s66
      %p68 = scmp.eq.s32.totalorder %s19, 0
      %p69 = por %p67, %p68
      %s70 = ssub.s32 %s20, %s39
      %s71 = ssub.s32 %s21, %s35
      %s72 = sor.u32 %s70, %s71
      %p73 = scmp.eq.s32.totalorder %s72, 0
      %s75 = sadd.s32 %s74, 1
      %s76 = scalar_select %p73, %s74, %s75
      %p79 = pneg %p73
      %p80 = scmp.eq.s32.totalorder %s13, 1
      %p81 = por %p79, %p80
      %p82 = scmp.ne.s32.totalorder %s74, %s77
      %p83 = scmp.eq.s32.totalorder %s13, 0
      %p84 = por %p82, %p83
      %p85 = scmp.ne.s32.totalorder %s74, %s77
      %p86 = scmp.eq.s32.totalorder %s18, 1
      %p87 = por %p85, %p86
      %p88 = scmp.ne.s32.totalorder %s77, %s78
      %p89 = scmp.eq.s32.totalorder %s18, 0
      %p90 = por %p88, %p89
      %p91 = scmp.ne.s32.totalorder %s77, %s78
      %p92 = scmp.eq.s32.totalorder %s19, 1
      %p93 = por %p91, %p92
      %p95 = scmp.ne.s32.totalorder %s78, %s94
      %p96 = scmp.eq.s32.totalorder %s19, 0
      %p97 = por %p95, %p96
      %p98 = scmp.le.s32.totalorder 1, %s13
      %p99 = scmp.lt.s32.totalorder %s13, 3
      %p100 = pnand %p98, %p99
      %p101 = pneg %p100
      // Predicated region
      $region9: #{tpu_custom_call.1} parent=5 // pred_check
        _
      $region10: #{tpu_custom_call.1} parent=5 // pred_check_branch
        %103 = sbr.rel (%p100) target = $region12
      $region11: #{tpu_custom_call.1} parent=5 // pred_region
        %s104 = ssub.s32 %s13, 1
      $region12: #{tpu_custom_call.1} parent=5 // pred_fallthru
        _
      %p105 = scmp.lt.s32.totalorder %s13, 2
      // Predicated region
      $region13: #{tpu_custom_call.1} parent=5 // pred_check
        %p106 = pneg %p105
      $region14: #{tpu_custom_call.1} parent=5 // pred_check_branch
        %108 = sbr.rel (%p106) target = $region16
      $region15: #{tpu_custom_call.1} parent=5 // pred_region
        // Predicated region
        $region17: #{tpu_custom_call.1} parent=15 // pred_check
          %p109 = pneg %p56
        $region18: #{tpu_custom_call.1} parent=15 // pred_check_branch
          %111 = sbr.rel (%p109) target = $region20
        $region19: #{tpu_custom_call.1} parent=15 // pred_region
          %s112 = sand.u32 %s46, 1
          %s113 = scalar_lea.sflag [#allocation4], %s112
          %s114 = sand.u32 %s46, 1
          %s115 = smul.addr %s114, 16
          %s116 = scalar_lea.vmem [#allocation3], %s115
          %s117 = smul.u32 2, %s22
          %119 = vsyncadd %s113, 0
          %s120 = sadd.s32 %s21, %s117
          %s121 = smul.addr %s20, 2
          %s122 = sadd.s32 %s120, %s121
          %s123 = smul.addr %s122, 8
          %s124 = scalar_lea.hbm %s0, %s123
          %s125 = sshll.u32 %s124, 4
          %s126 = int_to_ptr.hbm [resolvable:$true] %s125
          %s127 = sshll.u32 %s116, 4
          %s128 = int_to_ptr.vmem [resolvable:$true] %s127
          %133 = dma.hbm_to_vmem [thread:$0]  %s126, 256, %s128, %s113, 128, 128, 8
        $region20: #{tpu_custom_call.1} parent=15 // pred_fallthru
          _
      $region16: #{tpu_custom_call.1} parent=5 // pred_fallthru
        _
      %p134 = scmp.le.s32.totalorder 1, %s13
      %p135 = scmp.lt.s32.totalorder %s13, 3
      %p136 = pnand %p134, %p135
      %p137 = pneg %p136
      // Predicated region
      $region21: #{tpu_custom_call.1} parent=5 // pred_check
        _
      $region22: #{tpu_custom_call.1} parent=5 // pred_check_branch
        %139 = sbr.rel (%p136) target = $region24
      $region23: #{tpu_custom_call.1} parent=5 // pred_region
        %s140 = ssub.s32 %s13, 1
        %s141 = sand.u32 %s49, 1
        %s142 = scalar_lea.sflag [#allocation4], %s141
        %s143 = sand.u32 %s49, 1
        %s144 = smul.addr %s143, 16
        %s145 = scalar_lea.vmem [#allocation3], %s144
        // Predicated region
        $region25: #{tpu_custom_call.1} parent=23 // pred_check
          %p146 = pneg %p62
        $region26: #{tpu_custom_call.1} parent=23 // pred_check_branch
          %148 = sbr.rel (%p146) target = $region28
        $region27: #{tpu_custom_call.1} parent=23 // pred_region
          %150 = dma.done %s142, 256
        $region28: #{tpu_custom_call.1} parent=23 // pred_fallthru
          _
        %s151 = sand.u32 %s49, 1
        %s152 = scalar_lea.sflag [#allocation4], %s151
        %s153 = sand.u32 %s49, 1
        %s154 = smul.addr %s153, 16
        %s155 = scalar_lea.vmem [#allocation3], %s154
        %p156 = pneg %p62
        %p157 = pneg %p59
        %p158 = pneg %p90
        %p159 = pneg %p87
        %s160 = sand.u32 %s77, 1
        %s161 = scalar_lea.sflag [#allocation5], %s160
        %s162 = sand.u32 %s77, 1
        %s163 = scalar_lea.vmem [#allocation6], %s162
        %s164 = smul.u32 2, %s25
        %p165 = scmp.eq.s32.totalorder %s25, 0
        // Predicated region
        $region29: #{tpu_custom_call.1} parent=23 // pred_check
          %p166 = pneg %p165
        $region30: #{tpu_custom_call.1} parent=23 // pred_check_branch
          %168 = sbr.rel (%p166) target = $region32
        $region31: #{tpu_custom_call.1} parent=23 // pred_region
          %169 = vst [vmem:[#allocation2] sm:$0x1] 0.0
        $region32: #{tpu_custom_call.1} parent=23 // pred_fallthru
          _
        %v170 = vld [vmem:[%s145] sm:$0xff]
        %v171 = vld [vmem:[%s145 + $0x8] sm:$0xff]
        %v172 = vld [vmem:[#allocation2] sm:$0x1]
        %v173 = vadd.f32 %v170, %v171
        %v174 = vrot.slane %v173, 4
        %v175 = vadd.f32 %v173, %v174
        %v176 = vrot.slane %v175, 2
        %v177 = vadd.f32 %v175, %v176
        %v178 = vrot.slane %v177, 1
        %v179 = vadd.f32 %v177, %v178
        %v180 = vadd.f32 %v172, %v179
        %181 = vst [vmem:[#allocation2] sm:$0x1] %v180
        // Predicated region
        $region33: #{tpu_custom_call.1} parent=23 // pred_check
          %p182 = pneg %p165
        $region34: #{tpu_custom_call.1} parent=23 // pred_check_branch
          %184 = sbr.rel (%p182) target = $region36
        $region35: #{tpu_custom_call.1} parent=23 // pred_region
          %v185 = vld [vmem:[#allocation2] sm:$0x1]
          %186 = vst [vmem:[%s163] sm:$0x1] %v185
        $region36: #{tpu_custom_call.1} parent=23 // pred_fallthru
          _
        %s187 = sand.u32 %s77, 1
        %s188 = scalar_lea.sflag [#allocation5], %s187
        %s189 = sand.u32 %s77, 1
        %s190 = scalar_lea.vmem [#allocation6], %s189
        // Predicated region
        $region37: #{tpu_custom_call.1} parent=23 // pred_check
          %p191 = pneg %p87
        $region38: #{tpu_custom_call.1} parent=23 // pred_check_branch
          %193 = sbr.rel (%p191) target = $region40
        $region39: #{tpu_custom_call.1} parent=23 // pred_region
          %195 = vsyncadd %s188, 0
          %s196 = sadd.s32 %s24, %s23
          %s197 = scalar_lea.hbm %s1, %s196
          %s199 = sshll.u32 %s190, 4
          %s200 = int_to_ptr.vmem [resolvable:$true] %s199
          %s201 = sshll.u32 %s197, 4
          %s202 = int_to_ptr.hbm [resolvable:$true] %s201
          %204 = dma.vmem_to_hbm [thread:$0]  %s200, 16, %s202, %s188
        $region40: #{tpu_custom_call.1} parent=23 // pred_fallthru
          _
      $region24: #{tpu_custom_call.1} parent=5 // pred_fallthru
        _
      %p205 = scmp.le.s32.totalorder 2, %s13
      // Predicated region
      $region41: #{tpu_custom_call.1} parent=5 // pred_check
        %p206 = pneg %p205
      $region42: #{tpu_custom_call.1} parent=5 // pred_check_branch
        %208 = sbr.rel (%p206) target = $region44
      $region43: #{tpu_custom_call.1} parent=5 // pred_region
        %s209 = ssub.s32 %s13, 2
        // Predicated region
        $region45: #{tpu_custom_call.1} parent=43 // pred_check
          %p210 = pneg %p93
        $region46: #{tpu_custom_call.1} parent=43 // pred_check_branch
          %212 = sbr.rel (%p210) target = $region48
        $region47: #{tpu_custom_call.1} parent=43 // pred_region
          %s213 = sand.u32 %s78, 1
          %s214 = scalar_lea.sflag [#allocation5], %s213
          %s215 = sand.u32 %s78, 1
          %s216 = scalar_lea.vmem [#allocation6], %s215
          %218 = dma.done %s214, 16
        $region48: #{tpu_custom_call.1} parent=43 // pred_fallthru
          _
      $region44: #{tpu_custom_call.1} parent=5 // pred_fallthru
        _
    $region6: #{tpu_custom_call.1} parent=1 // loop_footer
      %s17 = sadd.s32 1, %s13
    $region7: #{tpu_custom_call.1} parent=1 // loop_footer_branch
      %12 = sbr.rel target = $region3
    $region8: #{tpu_custom_call.1} parent=1 // loop_exit
      _
    %219 = vsyncpa [#allocation4], 1
    %s220 = scalar_lea.sflag [#allocation4], 1
    %221 = vsyncpa %s220, 1
    %222 = vsyncpa [#allocation5], 1
    %s223 = scalar_lea.sflag [#allocation5], 1
    %224 = vsyncpa %s223, 1

</llo_original>
